<compile_context>
chip_gen: v5e
topology: v5e:2x2
jax: 0.10.0
libtpu: 0.0.40
codegen_flags: <defaults>
</compile_context>

<pallas_src>
import jax
import jax.numpy as jnp
from jax.experimental import pallas as pl
from jax.experimental.pallas import tpu as pltpu


def _round_up(x: int, m: int) -> int:
    return ((x + m - 1) // m) * m


def _trend_basis_kernel(theta_ref, basis_ref, out_ref):
    # One MXU matmul per batch tile: (tile_b, 2P) @ (2P, w) -> (tile_b, w),
    # f32 accumulation, no slicing or relayout inside the kernel.
    out_ref[...] = jnp.dot(
        theta_ref[...], basis_ref[...],
        preferred_element_type=jnp.float32,
    ).astype(out_ref.dtype)


def make_trend_basis(degree_of_polynomial: int, backcast_size: int,
                     forecast_size: int, max_tile_b: int = 4096):
    """Builds the deterministic polynomial basis buffers and returns a callable
    reproducing TrendBasis.forward(theta) -> (backcast, forecast)."""
    poly_size = degree_of_polynomial + 1
    two_p = 2 * poly_size

    # Same construction as the PyTorch buffers (0**0 == 1, as in torch.pow).
    backcast_time = jnp.stack(
        [jnp.power(jnp.arange(backcast_size, dtype=jnp.float32) / backcast_size, i)
         for i in range(poly_size)], axis=0)                 # (P, backcast_size)
    forecast_time = jnp.stack(
        [jnp.power(jnp.arange(forecast_size, dtype=jnp.float32) / forecast_size, i)
         for i in range(poly_size)], axis=0)                 # (P, forecast_size)

    # Block-diagonal combined basis, kept float32 (matches PyTorch buffers): (2P, w).
    w = backcast_size + forecast_size
    combined = jnp.zeros((two_p, w), dtype=jnp.float32)
    combined = combined.at[:poly_size, backcast_size:w].set(forecast_time)
    combined = combined.at[poly_size:, :backcast_size].set(backcast_time)

    # VMEM footprint per batch row (double-buffered theta tile + output tile),
    # accounting for lane padding to 128 in VMEM.
    _PER_ROW_BYTES = 2 * (_round_up(two_p, 128) + _round_up(w, 128)) * 4
    _VMEM_BUDGET = 12 * 1024 * 1024   # under the 16 MiB v5e scoped default

    def forward(theta, tile_b: int | None = None):
        B = theta.shape[0]
        assert theta.shape[1] == two_p
        out_dtype = jnp.promote_types(theta.dtype, jnp.float32)

        # Pad rows only to a multiple of 8 (sublane) — usually a no-op.
        b8 = _round_up(B, 8)
        theta_in = theta if b8 == B else jnp.pad(theta, ((0, b8 - B), (0, 0)))

        if tile_b is None:
            cap = max(8, ((_VMEM_BUDGET // _PER_ROW_BYTES) // 8) * 8)
            tile_b = min(max_tile_b, b8, cap)
            # Megacore (v7x): keep at least 2 grid steps when the batch allows it,
            # so dimension_semantics=("parallel",) can use both TensorCores.
            half = _round_up(-(-b8 // 2), 8)
            tile_b = min(tile_b, half)
        tile_b = max(8, _round_up(min(tile_b, b8), 8))

        grid = (pl.cdiv(b8, tile_b),)
        itemsize = jnp.dtype(theta.dtype).itemsize
        flops = 2 * b8 * two_p * w
        bytes_accessed = (b8 * two_p * itemsize + two_p * w * 4
                          + b8 * w * jnp.dtype(out_dtype).itemsize)

        out = pl.pallas_call(
            _trend_basis_kernel,
            out_shape=jax.ShapeDtypeStruct((b8, w), out_dtype),
            grid=grid,
            in_specs=[
                # theta tile marches over the batch axis (boundary block handled
                # by Pallas; padded rows are independent and discarded below).
                pl.BlockSpec((tile_b, two_p), lambda i: (i, 0)),
                # Tiny basis: constant block index -> resident in VMEM.
                pl.BlockSpec((two_p, w), lambda i: (0, 0)),
            ],
            # Unpadded last dim (full-extent block) -> no 128-lane-padded slab
            # written back to HBM.
            out_specs=pl.BlockSpec((tile_b, w), lambda i: (i, 0)),
            compiler_params=pltpu.CompilerParams(
                dimension_semantics=("parallel",)),
            cost_estimate=pl.CostEstimate(
                flops=flops, transcendentals=0, bytes_accessed=bytes_accessed),
        )(theta_in, combined)

        # Un-pad rows and split the fused slab (cheap XLA slices that fuse with
        # downstream consumers).
        backcast = out[:B, :backcast_size]
        forecast = out[:B, backcast_size:w]
        return backcast, forecast

    return forward, backcast_time, forecast_time


if __name__ == "__main__":
    # Small, deterministic example consistent with the module.
    degree_of_polynomial = 3          # -> polynomial_size P = 4
    backcast_size = 16
    forecast_size = 8
    batch = 2
    poly_size = degree_of_polynomial + 1

    key = jax.random.PRNGKey(0)
    theta = jax.random.normal(key, (batch, 2 * poly_size), dtype=jnp.float32)

    forward, bt, ft = make_trend_basis(degree_of_polynomial, backcast_size, forecast_size)
    backcast, forecast = forward(theta)
    jax.block_until_ready((backcast, forecast))

    # Reference check (plain JAX) to validate exact semantics.
    ref_back = theta[:, poly_size:] @ bt
    ref_fore = theta[:, :poly_size] @ ft
    assert backcast.shape == (batch, backcast_size)
    assert forecast.shape == (batch, forecast_size)
    assert jnp.allclose(backcast, ref_back, atol=1e-5, rtol=1e-5)
    assert jnp.allclose(forecast, ref_fore, atol=1e-5, rtol=1e-5)

    # Extra sanity check exercising the batch grid, the row padding to a multiple
    # of 8, and the non-divisible boundary block (B=42, tile_b=16 -> b8=48,
    # grid=(3,)).
    theta2 = jax.random.normal(jax.random.PRNGKey(0), (42, 2 * poly_size),
                               dtype=jnp.float32)
    b2, f2 = forward(theta2, tile_b=16)
    jax.block_until_ready((b2, f2))
    assert jnp.allclose(b2, theta2[:, poly_size:] @ bt, atol=1e-5, rtol=1e-5)
    assert jnp.allclose(f2, theta2[:, :poly_size] @ ft, atol=1e-5, rtol=1e-5)

    # Auto-tile path on a larger batch (exercises the >=2-grid-step megacore cap).
    theta3 = jax.random.normal(jax.random.PRNGKey(0), (512, 2 * poly_size),
                               dtype=jnp.float32)
    b3, f3 = forward(theta3)
    jax.block_until_ready((b3, f3))
    assert jnp.allclose(b3, theta3[:, poly_size:] @ bt, atol=1e-5, rtol=1e-5)
    assert jnp.allclose(f3, theta3[:, :poly_size] @ ft, atol=1e-5, rtol=1e-5)

    print("KERNEL_OK")
</pallas_src>

<mosaic_0001>
module attributes {stable_mosaic.version = 11 : i64} {
  func.func @_trend_basis_kernel(%arg0: i32, %arg1: memref<8x8xf32, #tpu.memory_space<vmem>>, %arg2: memref<8x24xf32, #tpu.memory_space<vmem>>, %arg3: memref<8x24xf32, #tpu.memory_space<vmem>>) attributes {dimension_semantics = [#tpu.dimension_semantics<parallel>], iteration_bounds = array<i64: 1>, scalar_prefetch = 0 : i64, scratch_operands = 0 : i64, tpu.core_type = #tpu.core_type<tc>, window_params = [{transform_indices = @transform_0, window_bounds = array<i64: 8, 8>}, {pipeline_mode = #tpu.pipeline_mode<synchronous>, transform_indices = @transform_1, window_bounds = array<i64: 8, 24>}, {transform_indices = @transform_2, window_bounds = array<i64: 8, 24>}]} {
    %c0 = arith.constant 0 : index
    %c0_0 = arith.constant 0 : index
    %0 = vector.load %arg1[%c0, %c0_0] : memref<8x8xf32, #tpu.memory_space<vmem>>, vector<8x8xf32>
    %c0_1 = arith.constant 0 : index
    %c0_2 = arith.constant 0 : index
    %1 = vector.load %arg2[%c0_1, %c0_2] : memref<8x24xf32, #tpu.memory_space<vmem>>, vector<8x24xf32>
    %cst = arith.constant dense<0.000000e+00> : vector<8x24xf32>
    %2 = tpu.matmul %0, %1, %cst {dimension_numbers = #tpu.dot_dimension_numbers<[1], [0], [0], [1], [0, 0, 1, 1], [], []>} : vector<8x8xf32>, vector<8x24xf32>, vector<8x24xf32> -> vector<8x24xf32>
    %c0_3 = arith.constant 0 : index
    %c0_4 = arith.constant 0 : index
    %3 = vector.load %arg3[%c0_3, %c0_4] : memref<8x24xf32, #tpu.memory_space<vmem>>, vector<8x24xf32>
    tpu.vector_store %arg3[%c0_3, %c0_4], %2 {strides = array<i32>} : memref<8x24xf32, #tpu.memory_space<vmem>>, vector<8x24xf32>,
    return
  }
  func.func @transform_0(%arg0: i32) -> (i32, i32) {
    %c0_i32 = arith.constant 0 : i32
    %c0_i32_0 = arith.constant 0 : i32
    return %arg0, %c0_i32 : i32, i32
  }
  func.func @transform_1(%arg0: i32) -> (i32, i32) {
    %c0_i32 = arith.constant 0 : i32
    %c0_i32_0 = arith.constant 0 : i32
    %c0_i32_1 = arith.constant 0 : i32
    return %c0_i32, %c0_i32_0 : i32, i32
  }
  func.func @transform_2(%arg0: i32) -> (i32, i32) {
    %c0_i32 = arith.constant 0 : i32
    %c0_i32_0 = arith.constant 0 : i32
    return %arg0, %c0_i32 : i32, i32
  }
}

</mosaic_0001>

<llo_original>
// kernel: tpu_custom_call.1
$region0: #{tpu_custom_call.1}
  #allocation0 [shape = 'u32[]', space=smem, size = 0x4, offset = 0x4, fixed_abs, tag = 'smem constant byte address 0x4 - core index']
  #allocation1 [shape = 'u32[72,128]{1,0:T(1,128)}', space=vmem, size = 0x9000, scoped, tag = 'internal scratch']
  %s0 = inlined_call_operand.hbm [shape: f32[8,8], index: 0, kind: input, shape index: {}]
  %s1 = inlined_call_operand.hbm [shape: f32[8,24], index: 1, kind: input, shape index: {}]
  %s2 = inlined_call_operand.hbm [shape: f32[8,24], index: 2, kind: output, shape index: {}]
  %s3 = sld [smem:[#allocation0]]
  $region26: #{tpu_custom_call.1} parent=0
    _
  %s5 = ssub.s32 1, %s3
  %s6 = scalar_select 0, %s5, %s3
  $region1: #{tpu_custom_call.1} parent=0
    #allocation2 [shape = 'u8[4096]{0}', space=vmem, size = 0x1000, scoped, tag = 'input window, operand 0, single buffered']
    #allocation3 [shape = 's32[1]{0}', space=sflag, size = 0x4, scoped, tag = 'scoped memory for tpu_custom_call.1']
    #allocation4 [shape = 's32[1]{0}', space=sflag, size = 0x4, scoped, tag = 'scoped memory for tpu_custom_call.1']
    #allocation5 [shape = 'u8[4096]{0}', space=vmem, size = 0x1000, scoped, tag = 'input window, operand 1, single buffered']
    #allocation6 [shape = 's32[1]{0}', space=sflag, size = 0x4, scoped, tag = 'scoped memory for tpu_custom_call.1']
    #allocation7 [shape = 'u8[4096]{0}', space=vmem, size = 0x1000, scoped, tag = 'output window, operand 0, single buffered']
    %7 = vsyncpa [#allocation3], 0
    %8 = vsyncpa [#allocation6], 0
    %9 = vsyncpa [#allocation4], 0
    // Predicated region
    $region2: #{tpu_custom_call.1} parent=1 // pred_check
      _
    $region3: #{tpu_custom_call.1} parent=1 // pred_check_branch
      %11 = sbr.rel (0) target = $region5
    $region4: #{tpu_custom_call.1} parent=1 // pred_region
      %13 = vsyncadd [#allocation3], 0
      %s15 = sshll.u32 %s0, 4
      %s16 = int_to_ptr.hbm [resolvable:$true] %s15
      %s17 = sshll.u32 [#allocation2], 4
      %s18 = int_to_ptr.vmem [resolvable:$true] %s17
      %20 = dma.hbm_to_vmem [thread:$0]  %s16, 128, %s18, [#allocation3]
    $region5: #{tpu_custom_call.1} parent=1 // pred_fallthru
      _
    // Predicated region
    $region6: #{tpu_custom_call.1} parent=1 // pred_check
      _
    $region7: #{tpu_custom_call.1} parent=1 // pred_check_branch
      %22 = sbr.rel (0) target = $region9
    $region8: #{tpu_custom_call.1} parent=1 // pred_region
      %24 = vsyncadd [#allocation6], 0
      %s26 = sshll.u32 %s1, 4
      %s27 = int_to_ptr.hbm [resolvable:$true] %s26
      %s28 = sshll.u32 [#allocation5], 4
      %s29 = int_to_ptr.vmem [resolvable:$true] %s28
      %31 = dma.hbm_to_vmem [thread:$0]  %s27, 128, %s29, [#allocation6]
    $region9: #{tpu_custom_call.1} parent=1 // pred_fallthru
      _
    // Predicated region
    $region10: #{tpu_custom_call.1} parent=1 // pred_check
      _
    $region11: #{tpu_custom_call.1} parent=1 // pred_check_branch
      %33 = sbr.rel (0) target = $region13
    $region12: #{tpu_custom_call.1} parent=1 // pred_region
      %35 = dma.done [#allocation3], 128
    $region13: #{tpu_custom_call.1} parent=1 // pred_fallthru
      _
    // Predicated region
    $region14: #{tpu_custom_call.1} parent=1 // pred_check
      _
    $region15: #{tpu_custom_call.1} parent=1 // pred_check_branch
      %37 = sbr.rel (0) target = $region17
    $region16: #{tpu_custom_call.1} parent=1 // pred_region
      %39 = dma.done [#allocation6], 128
    $region17: #{tpu_custom_call.1} parent=1 // pred_fallthru
      _
    %v40 = vld [vmem:[#allocation2] sm:$0xff]
    %v41 = vld [vmem:[#allocation5] sm:$0xff]
    %vm42 = vcmask 64512
    %v44 = vsel %vm42, %v40, 0
    %46 = vmatpush.msra.mxu0 0.0
    %47 = vmatpush.msra.mxu0 0.0
    %48 = vmatpush.msra.mxu0 0.0
    %49 = vmatpush.msra.mxu0 0.0
    %50 = vmatpush.msra.mxu0 0.0
    %51 = vmatpush.msra.mxu0 0.0
    %52 = vmatpush.msra.mxu0 0.0
    %53 = vmatpush.msra.mxu0 0.0
    %54 = vmatpush.msra.mxu0 0.0
    %55 = vmatpush.msra.mxu0 0.0
    %56 = vmatpush.msra.mxu0 0.0
    %57 = vmatpush.msra.mxu0 0.0
    %58 = vmatpush.msra.mxu0 0.0
    %59 = vmatpush.msra.mxu0 0.0
    %60 = vmatpush.msra.mxu0 0.0
    %61 = vmatpush.msra.mxu0 %v41
    %62 = vmatmul.f32.gmra.mxu0 %v44
    %v63 = vpop.f32.mrf.mxu0
    %v64 = vadd.f32 0.0, %v63
    %65 = vdwg.mxu0
    %vm66 = vcmask 195584
    %67 = vst.msk [vmem:[#allocation7] sm:$0xff] %vm66, %v64
    // Predicated region
    $region18: #{tpu_custom_call.1} parent=1 // pred_check
      _
    $region19: #{tpu_custom_call.1} parent=1 // pred_check_branch
      %69 = sbr.rel (0) target = $region21
    $region20: #{tpu_custom_call.1} parent=1 // pred_region
      %71 = vsyncadd [#allocation4], 0
      %s73 = sshll.u32 [#allocation7], 4
      %s74 = int_to_ptr.vmem [resolvable:$true] %s73
      %s75 = sshll.u32 %s2, 4
      %s76 = int_to_ptr.hbm [resolvable:$true] %s75
      %78 = dma.vmem_to_hbm [thread:$0]  %s74, 128, %s76, [#allocation4]
    $region21: #{tpu_custom_call.1} parent=1 // pred_fallthru
      _
    // Predicated region
    $region22: #{tpu_custom_call.1} parent=1 // pred_check
      _
    $region23: #{tpu_custom_call.1} parent=1 // pred_check_branch
      %80 = sbr.rel (0) target = $region25
    $region24: #{tpu_custom_call.1} parent=1 // pred_region
      %82 = dma.done [#allocation4], 128
    $region25: #{tpu_custom_call.1} parent=1 // pred_fallthru
      _
    %83 = vsyncpa [#allocation3], 1
    %84 = vsyncpa [#allocation6], 1
    %85 = vsyncpa [#allocation4], 1

</llo_original>
